<compile_context>
chip_gen: v7x
topology: tpu7x:2x2x1
jax: 0.10.0
libtpu: 0.0.40
codegen_flags: <defaults>
</compile_context>

<pallas_src>
import jax
import jax.numpy as jnp
from jax.experimental import pallas as pl
from jax.experimental.pallas import tpu as pltpu

_LANE = 128
_VMEM_STEP_BUDGET = 16 * 1024 * 1024   # per-step working set target (incl. double buffers)
_VMEM_LIMIT_BYTES = 48 * 1024 * 1024   # scoped-VMEM limit: headroom on v5e/v6e (128 MiB)
                                        # and under v7x's 64 MiB physical VMEM


def _round_up(x, m):
    return ((x + m - 1) // m) * m


def _cdiv(a, b):
    return (a + b - 1) // b


def _block_bytes(n_tile, C, lanes, itemsize):
    # VMEM footprint of an (n_tile, C, lanes) block: the last two dims are tiled, so the
    # sublane axis pads C up to 8 rows (f32) / 16 (bf16) and the lane axis up to 128.
    rows = 8 * max(1, 4 // itemsize)
    return n_tile * _round_up(C, rows) * _round_up(lanes, _LANE) * itemsize


def _step_bytes(n_tile, C, lanes, io_itemsize):
    io = 3 * 2 * _block_bytes(n_tile, C, lanes, io_itemsize)   # 2 inputs + 1 output, double-buffered
    tmp = 3 * _block_bytes(n_tile, C, lanes, 4)                # in-kernel f32 temporaries
    return io + tmp


def _choose_tiles(N, C, HW, io_itemsize):
    hw128 = _round_up(HW, _LANE)
    if _step_bytes(1, C, hw128, io_itemsize) <= _VMEM_STEP_BUDGET:
        # Full spatial extent per block: one contiguous DMA row segment per (n, c),
        # no padding and no masked tail.
        tile_hw = HW
        hw_steps = 1
    else:
        # 128-multiple lane tile in the 512-1024 sweet spot; partial tail block is
        # handled by the cdiv grid (masked stores), never by a wrapper-side pad.
        tile_hw = min(1024, hw128)
        while tile_hw > _LANE and _step_bytes(1, C, tile_hw, io_itemsize) > _VMEM_STEP_BUDGET:
            tile_hw -= _LANE
        hw_steps = _cdiv(HW, tile_hw)

    # Fold batch elements to amortize per-step overhead; cap so the total grid keeps
    # at least 2 steps (v7x has 2 TensorCores per chip).
    max_n = N if hw_steps > 1 else max(1, _cdiv(N, 2))
    n_tile = 1
    for d in range(max_n, 0, -1):
        if _step_bytes(d, C, tile_hw, io_itemsize) <= _VMEM_STEP_BUDGET:
            n_tile = d
            break
    return n_tile, tile_hw


def attblock_kernel(fq_ref, fk_ref, o_ref):
    # Block: (N_TILE, C, TILE_HW). Softmax over the channel axis (axis=1), which is
    # per-lane, so any garbage lanes of a masked tail block never contaminate valid
    # lanes (their stores are masked anyway).
    fq = fq_ref[...].astype(jnp.float32)
    fk = fk_ref[...].astype(jnp.float32)

    s = fq * fk              # logits
    sum_qk = fq + fk         # computed early so fq/fk die before the softmax chain

    m = jnp.max(s, axis=1, keepdims=True)          # channel-wise max (stability)
    e = jnp.exp(s - m)
    denom = jnp.sum(e, axis=1, keepdims=True)

    # Fused: no materialized `w`; exact division for parity with the PyTorch reference
    # (the kernel is HBM-bound, so the exact path is free).
    o_ref[...] = ((e * sum_qk) / denom).astype(o_ref.dtype)


def att_block(fq, fk):
    """fq, fk: (N, C, H, W) -> out (N, C, H, W). Matches nn.Softmax()(fq*fk) * (fq+fk)."""
    assert fq.shape == fk.shape
    N, C, H, W = fq.shape
    HW = H * W
    itemsize = jnp.dtype(fq.dtype).itemsize

    n_tile, tile_hw = _choose_tiles(N, C, HW, itemsize)

    fq3 = fq.reshape(N, C, HW)
    fk3 = fk.reshape(N, C, HW)

    grid = (pl.cdiv(N, n_tile), pl.cdiv(HW, tile_hw))
    block = (n_tile, C, tile_hw)
    spec = pl.BlockSpec(block, lambda i, j: (i, 0, j))

    cost = pl.CostEstimate(
        flops=6 * N * C * HW,                      # mul, add, sub, max, sum, div (~per elem)
        transcendentals=N * C * HW,                # one exp per element
        bytes_accessed=3 * N * C * HW * itemsize,  # 2 reads + 1 write
    )

    out3 = pl.pallas_call(
        attblock_kernel,
        out_shape=jax.ShapeDtypeStruct((N, C, HW), fq.dtype),
        grid_spec=pltpu.PrefetchScalarGridSpec(
            num_scalar_prefetch=0,
            grid=grid,
            in_specs=[spec, spec],
            out_specs=spec,
        ),
        compiler_params=pltpu.CompilerParams(
            dimension_semantics=("parallel", "parallel"),
            vmem_limit_bytes=_VMEM_LIMIT_BYTES,
        ),
        cost_estimate=cost,
    )(fq3, fk3)

    return out3.reshape(N, C, H, W)


def att_block_ref(fq, fk):
    """Pure-JAX reference matching PyTorch nn.Softmax()(fq*fk) with dim=1 for 4-D."""
    s = fq * fk
    w = jax.nn.softmax(s, axis=1)
    return w * (fq + fk)


if __name__ == "__main__":
    key = jax.random.PRNGKey(0)
    k1, k2, k3, k4, k5, k6 = jax.random.split(key, 6)

    # Main test: spec-sized inputs (H*W a multiple of 128).
    N, C, H, W = 2, 4, 16, 16
    fq = jax.random.normal(k1, (N, C, H, W), dtype=jnp.float32)
    fk = jax.random.normal(k2, (N, C, H, W), dtype=jnp.float32)
    out = jax.block_until_ready(att_block(fq, fk))
    ref = att_block_ref(fq, fk)
    assert out.shape == (N, C, H, W)
    assert jnp.allclose(out, ref, atol=1e-5, rtol=1e-5), "mismatch vs reference"

    # DenseNet-style non-128-multiple spatial (full-extent lane dim, no padding).
    N2, C2, H2, W2 = 2, 4, 7, 7
    fq2 = jax.random.normal(k3, (N2, C2, H2, W2), dtype=jnp.float32)
    fk2 = jax.random.normal(k4, (N2, C2, H2, W2), dtype=jnp.float32)
    out2 = jax.block_until_ready(att_block(fq2, fk2))
    ref2 = att_block_ref(fq2, fk2)
    assert out2.shape == (N2, C2, H2, W2)
    assert jnp.allclose(out2, ref2, atol=1e-5, rtol=1e-5), "mismatch vs reference (7x7)"

    # Odd batch: exercises the cdiv batch grid with a partial (masked) batch tile.
    N3, C3, H3, W3 = 3, 4, 7, 7
    fq3 = jax.random.normal(k5, (N3, C3, H3, W3), dtype=jnp.float32)
    fk3 = jax.random.normal(k6, (N3, C3, H3, W3), dtype=jnp.float32)
    out3 = jax.block_until_ready(att_block(fq3, fk3))
    ref3 = att_block_ref(fq3, fk3)
    assert out3.shape == (N3, C3, H3, W3)
    assert jnp.allclose(out3, ref3, atol=1e-5, rtol=1e-5), "mismatch vs reference (odd N)"

    print("KERNEL_OK")
</pallas_src>

<mosaic_0001>
module attributes {stable_mosaic.version = 11 : i64} {
  func.func @attblock_kernel(%arg0: i32, %arg1: i32, %arg2: memref<1x4x256xf32, #tpu.memory_space<vmem>>, %arg3: memref<1x4x256xf32, #tpu.memory_space<vmem>>, %arg4: memref<1x4x256xf32, #tpu.memory_space<vmem>>) attributes {dimension_semantics = [#tpu.dimension_semantics<parallel>, #tpu.dimension_semantics<parallel>], iteration_bounds = array<i64: 2, 1>, scalar_prefetch = 0 : i64, scratch_operands = 0 : i64, tpu.core_type = #tpu.core_type<tc>, window_params = [{transform_indices = @transform_0, window_bounds = array<i64: 1, 4, 256>}, {transform_indices = @transform_1, window_bounds = array<i64: 1, 4, 256>}, {transform_indices = @transform_2, window_bounds = array<i64: 1, 4, 256>}]} {
    %c0 = arith.constant 0 : index
    %c0_0 = arith.constant 0 : index
    %c0_1 = arith.constant 0 : index
    %0 = vector.load %arg2[%c0, %c0_0, %c0_1] : memref<1x4x256xf32, #tpu.memory_space<vmem>>, vector<1x4x256xf32>
    %c0_2 = arith.constant 0 : index
    %c0_3 = arith.constant 0 : index
    %c0_4 = arith.constant 0 : index
    %1 = vector.load %arg3[%c0_2, %c0_3, %c0_4] : memref<1x4x256xf32, #tpu.memory_space<vmem>>, vector<1x4x256xf32>
    %2 = arith.mulf %0, %1 : vector<1x4x256xf32>
    %3 = arith.addf %0, %1 : vector<1x4x256xf32>
    %cst = arith.constant dense<0xFF800000> : vector<1x256xf32>
    %4 = vector.multi_reduction <maximumf>, %2, %cst [1] : vector<1x4x256xf32> to vector<1x256xf32>
    %5 = vector.shape_cast %4 : vector<1x256xf32> to vector<1x1x256xf32>
    %6 = vector.broadcast %5 : vector<1x1x256xf32> to vector<1x4x256xf32>
    %7 = arith.subf %2, %6 : vector<1x4x256xf32>
    %8 = math.exp %7 : vector<1x4x256xf32>
    %cst_5 = arith.constant dense<0.000000e+00> : vector<1x256xf32>
    %9 = vector.multi_reduction <add>, %8, %cst_5 [1] : vector<1x4x256xf32> to vector<1x256xf32>
    %10 = vector.shape_cast %9 : vector<1x256xf32> to vector<1x1x256xf32>
    %11 = arith.mulf %8, %3 : vector<1x4x256xf32>
    %12 = vector.broadcast %10 : vector<1x1x256xf32> to vector<1x4x256xf32>
    %13 = arith.divf %11, %12 : vector<1x4x256xf32>
    %c0_6 = arith.constant 0 : index
    %c0_7 = arith.constant 0 : index
    %c0_8 = arith.constant 0 : index
    %14 = vector.load %arg4[%c0_6, %c0_7, %c0_8] : memref<1x4x256xf32, #tpu.memory_space<vmem>>, vector<1x4x256xf32>
    tpu.vector_store %arg4[%c0_6, %c0_7, %c0_8], %13 {strides = array<i32>} : memref<1x4x256xf32, #tpu.memory_space<vmem>>, vector<1x4x256xf32>,
    return
  }
  func.func @transform_0(%arg0: i32, %arg1: i32) -> (i32, i32, i32) {
    %c0_i32 = arith.constant 0 : i32
    %c0_i32_0 = arith.constant 0 : i32
    return %arg0, %c0_i32, %arg1 : i32, i32, i32
  }
  func.func @transform_1(%arg0: i32, %arg1: i32) -> (i32, i32, i32) {
    %c0_i32 = arith.constant 0 : i32
    %c0_i32_0 = arith.constant 0 : i32
    return %arg0, %c0_i32, %arg1 : i32, i32, i32
  }
  func.func @transform_2(%arg0: i32, %arg1: i32) -> (i32, i32, i32) {
    %c0_i32 = arith.constant 0 : i32
    %c0_i32_0 = arith.constant 0 : i32
    return %arg0, %c0_i32, %arg1 : i32, i32, i32
  }
}

</mosaic_0001>

<llo_original>
// kernel: tpu_custom_call.1
$region0: #{tpu_custom_call.1}
  #allocation0 [shape = 'u32[]', space=smem, size = 0x4, offset = 0x4, fixed_abs, tag = 'smem constant byte address 0x4 - core index']
  #allocation1 [shape = 'u32[144,128]{1,0:T(1,128)}', space=vmem, size = 0x12000, scoped, tag = 'internal scratch']
  %s0 = inlined_call_operand.hbm [shape: f32[2,4,256], index: 0, kind: input, shape index: {}]
  %s1 = inlined_call_operand.hbm [shape: f32[2,4,256], index: 1, kind: input, shape index: {}]
  %s2 = inlined_call_operand.hbm [shape: f32[2,4,256], index: 2, kind: output, shape index: {}]
  %s3 = sld [smem:[#allocation0]]
  $region49: #{tpu_custom_call.1} parent=0
    _
  %s5 = ssub.s32 1, %s3
  %s6 = scalar_select 0, %s5, %s3
  $region1: #{tpu_custom_call.1} parent=0
    #allocation2 [shape = 'u8[8192]{0}', space=vmem, size = 0x2000, scoped, tag = 'input window, operand 0']
    #allocation3 [shape = 's32[2]{0}', space=sflag, size = 0x8, scoped, tag = 'scoped memory for tpu_custom_call.1']
    #allocation4 [shape = 's32[2]{0}', space=sflag, size = 0x8, scoped, tag = 'scoped memory for tpu_custom_call.1']
    #allocation5 [shape = 'u8[8192]{0}', space=vmem, size = 0x2000, scoped, tag = 'input window, operand 1']
    #allocation6 [shape = 's32[2]{0}', space=sflag, size = 0x8, scoped, tag = 'scoped memory for tpu_custom_call.1']
    #allocation7 [shape = 'u8[8192]{0}', space=vmem, size = 0x2000, scoped, tag = 'output window, operand 0']
    %7 = vsyncpa [#allocation3], 0
    %s8 = scalar_lea.sflag [#allocation3], 1
    %9 = vsyncpa %s8, 0
    %10 = vsyncpa [#allocation6], 0
    %s11 = scalar_lea.sflag [#allocation6], 1
    %12 = vsyncpa %s11, 0
    %13 = vsyncpa [#allocation4], 0
    %s14 = scalar_lea.sflag [#allocation4], 1
    %15 = vsyncpa %s14, 0
    loop: start=0, step=1, limit=4
    $region2: #{tpu_custom_call.1} parent=1 // loop_pre_header
      _
    $region3: #{tpu_custom_call.1} parent=1 // loop_header
      %s17 = sphi 0, %s21
      %p18 = scmp.ge.s32.totalorder %s17, 4
      %s24 = sphi 0, %s36
      %s25 = sphi 0, %s32
      %s26 = sphi 0, %s24
      %s27 = sphi 0, %s25
      %s28 = sphi 0, %s26
      %s29 = sphi 0, %s27
      %s41 = sphi 0, %s43
      %s44 = sphi 0, %s41
      %s45 = sphi 0, %s44
      %s61 = sphi 0, %s45
      %s69 = sphi 0, %s71
      %s72 = sphi 0, %s69
      %s73 = sphi 0, %s72
      %s89 = sphi 0, %s73
      %s97 = sphi 0, %s99
      %s100 = sphi 0, %s97
      %s101 = sphi 0, %s100
      %s117 = sphi 0, %s101
    $region4: #{tpu_custom_call.1} parent=1 // loop_header_branch
      %20 = sbr.rel (%p18) target = $region8
    $region5: #{tpu_custom_call.1} parent=1 // loop_body
      %s22 = ssub.s32 %s17, 1
      %s23 = ssub.s32 %s17, 2
      %s30 = sadd.s32 1, %s25
      %p31 = scmp.ge.s32.totalorder %s30, 1
      %s32 = scalar_select %p31, 0, %s30
      %s33 = sadd.s32 1, %s24
      %s34 = scalar_select %p31, %s33, %s24
      %p35 = scmp.ge.s32.totalorder %s34, 2
      %s36 = scalar_select %p35, 0, %s34
      %s37 = ssub.s32 %s24, %s36
      %s38 = ssub.s32 %s25, %s32
      %s39 = sor.u32 %s37, %s38
      %p40 = scmp.eq.s32.totalorder %s39, 0
      %s42 = sadd.s32 %s41, 1
      %s43 = scalar_select %p40, %s41, %s42
      %p46 = pneg %p40
      %p47 = scmp.eq.s32.totalorder %s17, 1
      %p48 = por %p46, %p47
      %p49 = scmp.ne.s32.totalorder %s41, %s44
      %p50 = scmp.eq.s32.totalorder %s17, 0
      %p51 = por %p49, %p50
      %p52 = scmp.ne.s32.totalorder %s41, %s44
      %p53 = scmp.eq.s32.totalorder %s22, 1
      %p54 = por %p52, %p53
      %p55 = scmp.ne.s32.totalorder %s44, %s45
      %p56 = scmp.eq.s32.totalorder %s22, 0
      %p57 = por %p55, %p56
      %p58 = scmp.ne.s32.totalorder %s44, %s45
      %p59 = scmp.eq.s32.totalorder %s23, 1
      %p60 = por %p58, %p59
      %p62 = scmp.ne.s32.totalorder %s45, %s61
      %p63 = scmp.eq.s32.totalorder %s23, 0
      %p64 = por %p62, %p63
      %s65 = ssub.s32 %s24, %s36
      %s66 = ssub.s32 %s25, %s32
      %s67 = sor.u32 %s65, %s66
      %p68 = scmp.eq.s32.totalorder %s67, 0
      %s70 = sadd.s32 %s69, 1
      %s71 = scalar_select %p68, %s69, %s70
      %p74 = pneg %p68
      %p75 = scmp.eq.s32.totalorder %s17, 1
      %p76 = por %p74, %p75
      %p77 = scmp.ne.s32.totalorder %s69, %s72
      %p78 = scmp.eq.s32.totalorder %s17, 0
      %p79 = por %p77, %p78
      %p80 = scmp.ne.s32.totalorder %s69, %s72
      %p81 = scmp.eq.s32.totalorder %s22, 1
      %p82 = por %p80, %p81
      %p83 = scmp.ne.s32.totalorder %s72, %s73
      %p84 = scmp.eq.s32.totalorder %s22, 0
      %p85 = por %p83, %p84
      %p86 = scmp.ne.s32.totalorder %s72, %s73
      %p87 = scmp.eq.s32.totalorder %s23, 1
      %p88 = por %p86, %p87
      %p90 = scmp.ne.s32.totalorder %s73, %s89
      %p91 = scmp.eq.s32.totalorder %s23, 0
      %p92 = por %p90, %p91
      %s93 = ssub.s32 %s24, %s36
      %s94 = ssub.s32 %s25, %s32
      %s95 = sor.u32 %s93, %s94
      %p96 = scmp.eq.s32.totalorder %s95, 0
      %s98 = sadd.s32 %s97, 1
      %s99 = scalar_select %p96, %s97, %s98
      %p102 = pneg %p96
      %p103 = scmp.eq.s32.totalorder %s17, 1
      %p104 = por %p102, %p103
      %p105 = scmp.ne.s32.totalorder %s97, %s100
      %p106 = scmp.eq.s32.totalorder %s17, 0
      %p107 = por %p105, %p106
      %p108 = scmp.ne.s32.totalorder %s97, %s100
      %p109 = scmp.eq.s32.totalorder %s22, 1
      %p110 = por %p108, %p109
      %p111 = scmp.ne.s32.totalorder %s100, %s101
      %p112 = scmp.eq.s32.totalorder %s22, 0
      %p113 = por %p111, %p112
      %p114 = scmp.ne.s32.totalorder %s100, %s101
      %p115 = scmp.eq.s32.totalorder %s23, 1
      %p116 = por %p114, %p115
      %p118 = scmp.ne.s32.totalorder %s101, %s117
      %p119 = scmp.eq.s32.totalorder %s23, 0
      %p120 = por %p118, %p119
      %p121 = scmp.le.s32.totalorder 1, %s17
      %p122 = scmp.lt.s32.totalorder %s17, 3
      %p123 = pnand %p121, %p122
      %p124 = pneg %p123
      // Predicated region
      $region9: #{tpu_custom_call.1} parent=5 // pred_check
        _
      $region10: #{tpu_custom_call.1} parent=5 // pred_check_branch
        %126 = sbr.rel (%p123) target = $region12
      $region11: #{tpu_custom_call.1} parent=5 // pred_region
        %s127 = ssub.s32 %s17, 1
      $region12: #{tpu_custom_call.1} parent=5 // pred_fallthru
        _
      %p128 = scmp.lt.s32.totalorder %s17, 2
      // Predicated region
      $region13: #{tpu_custom_call.1} parent=5 // pred_check
        %p129 = pneg %p128
      $region14: #{tpu_custom_call.1} parent=5 // pred_check_branch
        %131 = sbr.rel (%p129) target = $region16
      $region15: #{tpu_custom_call.1} parent=5 // pred_region
        // Predicated region
        $region17: #{tpu_custom_call.1} parent=15 // pred_check
          %p132 = pneg %p51
        $region18: #{tpu_custom_call.1} parent=15 // pred_check_branch
          %134 = sbr.rel (%p132) target = $region20
        $region19: #{tpu_custom_call.1} parent=15 // pred_region
          %s135 = sand.u32 %s41, 1
          %s136 = scalar_lea.sflag [#allocation3], %s135
          %s137 = sand.u32 %s41, 1
          %s138 = smul.addr %s137, 8
          %s139 = scalar_lea.vmem [#allocation2], %s138
          %s140 = smul.u32 2, %s25
          %s142 = ssub.s32 128, 128
          %143 = vsyncadd %s136, %s142
          %s144 = smul.addr %s24, 2
          %s145 = sadd.s32 %s140, %s144
          %s146 = smul.addr %s145, 64
          %s147 = scalar_lea.hbm %s0, %s146
          %s149 = sshll.u32 %s139, 4
          %s150 = int_to_ptr.vmem [resolvable:$true] %s149
          %152 = dma.hbm_to_vmem [thread:$0]  %s147, 128, %s150, %s136
        $region20: #{tpu_custom_call.1} parent=15 // pred_fallthru
          _
        // Predicated region
        $region21: #{tpu_custom_call.1} parent=15 // pred_check
          %p153 = pneg %p79
        $region22: #{tpu_custom_call.1} parent=15 // pred_check_branch
          %155 = sbr.rel (%p153) target = $region24
        $region23: #{tpu_custom_call.1} parent=15 // pred_region
          %s156 = sand.u32 %s69, 1
          %s157 = scalar_lea.sflag [#allocation6], %s156
          %s158 = sand.u32 %s69, 1
          %s159 = smul.addr %s158, 8
          %s160 = scalar_lea.vmem [#allocation5], %s159
          %s161 = smul.u32 2, %s25
          %s163 = ssub.s32 128, 128
          %164 = vsyncadd %s157, %s163
          %s165 = smul.addr %s24, 2
          %s166 = sadd.s32 %s161, %s165
          %s167 = smul.addr %s166, 64
          %s168 = scalar_lea.hbm %s1, %s167
          %s170 = sshll.u32 %s160, 4
          %s171 = int_to_ptr.vmem [resolvable:$true] %s170
          %173 = dma.hbm_to_vmem [thread:$0]  %s168, 128, %s171, %s157
        $region24: #{tpu_custom_call.1} parent=15 // pred_fallthru
          _
      $region16: #{tpu_custom_call.1} parent=5 // pred_fallthru
        _
      %p174 = scmp.le.s32.totalorder 1, %s17
      %p175 = scmp.lt.s32.totalorder %s17, 3
      %p176 = pnand %p174, %p175
      %p177 = pneg %p176
      // Predicated region
      $region25: #{tpu_custom_call.1} parent=5 // pred_check
        _
      $region26: #{tpu_custom_call.1} parent=5 // pred_check_branch
        %179 = sbr.rel (%p176) target = $region28
      $region27: #{tpu_custom_call.1} parent=5 // pred_region
        %s180 = ssub.s32 %s17, 1
        %s181 = sand.u32 %s44, 1
        %s182 = scalar_lea.sflag [#allocation3], %s181
        %s183 = sand.u32 %s44, 1
        %s184 = smul.addr %s183, 8
        %s185 = scalar_lea.vmem [#allocation2], %s184
        // Predicated region
        $region29: #{tpu_custom_call.1} parent=27 // pred_check
          %p186 = pneg %p57
        $region30: #{tpu_custom_call.1} parent=27 // pred_check_branch
          %188 = sbr.rel (%p186) target = $region32
        $region31: #{tpu_custom_call.1} parent=27 // pred_region
          %189 = dma.done %s182, 128
        $region32: #{tpu_custom_call.1} parent=27 // pred_fallthru
          _
        %s190 = sand.u32 %s72, 1
        %s191 = scalar_lea.sflag [#allocation6], %s190
        %s192 = sand.u32 %s72, 1
        %s193 = smul.addr %s192, 8
        %s194 = scalar_lea.vmem [#allocation5], %s193
        // Predicated region
        $region33: #{tpu_custom_call.1} parent=27 // pred_check
          %p195 = pneg %p85
        $region34: #{tpu_custom_call.1} parent=27 // pred_check_branch
          %197 = sbr.rel (%p195) target = $region36
        $region35: #{tpu_custom_call.1} parent=27 // pred_region
          %198 = dma.done %s191, 128
        $region36: #{tpu_custom_call.1} parent=27 // pred_fallthru
          _
        %s199 = sand.u32 %s44, 1
        %s200 = scalar_lea.sflag [#allocation3], %s199
        %s201 = sand.u32 %s44, 1
        %s202 = smul.addr %s201, 8
        %s203 = scalar_lea.vmem [#allocation2], %s202
        %p204 = pneg %p57
        %p205 = pneg %p54
        %s206 = sand.u32 %s72, 1
        %s207 = scalar_lea.sflag [#allocation6], %s206
        %s208 = sand.u32 %s72, 1
        %s209 = smul.addr %s208, 8
        %s210 = scalar_lea.vmem [#allocation5], %s209
        %p211 = pneg %p85
        %p212 = pneg %p82
        %p213 = pneg %p113
        %p214 = pneg %p110
        %s215 = sand.u32 %s100, 1
        %s216 = scalar_lea.sflag [#allocation4], %s215
        %s217 = sand.u32 %s100, 1
        %s218 = smul.addr %s217, 8
        %s219 = scalar_lea.vmem [#allocation7], %s218
        %s220 = smul.u32 2, %s27
        %s221 = smul.u32 2, %s27
        %s222 = smul.u32 2, %s27
        %v223 = vld [vmem:[%s185] sm:$0xff]
        %v224 = vld [vmem:[%s194] sm:$0xff]
        %v225 = vmul.f32 %v223, %v224
        %v226 = vadd.f32 %v223, %v224
        %v228 = vcombine.high %v225, %v225
        %vm230 = vcmask 1043456
        %v231 = vsel %vm230, %v225, -inf
        %v232 = vrot.slane %v231, 4
        %v233 = vmax.f32 %v231, %v232
        %v234 = vrot.slane %v233, 2
        %v235 = vmax.f32 %v233, %v234
        %v236 = vrot.slane %v235, 1
        %v237 = vmax.f32 %v235, %v236
        %v238 = vsel %vm230, %v228, -inf
        %v239 = vrot.slane %v238, 4
        %v240 = vmax.f32 %v238, %v239
        %v241 = vrot.slane %v240, 2
        %v242 = vmax.f32 %v240, %v241
        %v243 = vrot.slane %v242, 1
        %v244 = vmax.f32 %v242, %v243
        %v247 = vcombine.low %v237, %v244
        %v249 = vsub.f32 %v225, %v247
        %v250 = vmul.f32 %v249, 1.442695
        %v251 = vpow.pop %v250
        %v253 = vcombine.high %v251, %v251
        %v255 = vsel %vm230, %v251, 0.0
        %v256 = vrot.slane %v255, 4
        %v257 = vadd.f32 %v255, %v256
        %v258 = vrot.slane %v257, 2
        %v259 = vadd.f32 %v257, %v258
        %v260 = vrot.slane %v259, 1
        %v261 = vadd.f32 %v259, %v260
        %v262 = vsel %vm230, %v253, 0.0
        %v263 = vrot.slane %v262, 4
        %v264 = vadd.f32 %v262, %v263
        %v265 = vrot.slane %v264, 2
        %v266 = vadd.f32 %v264, %v265
        %v267 = vrot.slane %v266, 1
        %v268 = vadd.f32 %v266, %v267
        %v269 = vmul.f32 %v251, %v226
        %v272 = vcombine.low %v261, %v268
        %v274 = vrcp.pop %v272
        %v275 = vmul.f32 %v269, %v274
        %276 = vst [vmem:[%s219] sm:$0xff] %v275
        %s277 = sand.u32 %s100, 1
        %s278 = scalar_lea.sflag [#allocation4], %s277
        %s279 = sand.u32 %s100, 1
        %s280 = smul.addr %s279, 8
        %s281 = scalar_lea.vmem [#allocation7], %s280
        // Predicated region
        $region37: #{tpu_custom_call.1} parent=27 // pred_check
          %p282 = pneg %p110
        $region38: #{tpu_custom_call.1} parent=27 // pred_check_branch
          %284 = sbr.rel (%p282) target = $region40
        $region39: #{tpu_custom_call.1} parent=27 // pred_region
          %s285 = smul.u32 2, %s27
          %s287 = ssub.s32 128, 128
          %288 = vsyncadd %s278, %s287
          %s289 = smul.addr %s26, 2
          %s290 = sadd.s32 %s285, %s289
          %s291 = smul.addr %s290, 64
          %s292 = scalar_lea.hbm %s2, %s291
          %s294 = sshll.u32 %s281, 4
          %s295 = int_to_ptr.vmem [resolvable:$true] %s294
          %297 = dma.vmem_to_hbm [thread:$0]  %s295, 128, %s292, %s278
        $region40: #{tpu_custom_call.1} parent=27 // pred_fallthru
          _
      $region28: #{tpu_custom_call.1} parent=5 // pred_fallthru
        _
      %p298 = scmp.le.s32.totalorder 2, %s17
      // Predicated region
      $region41: #{tpu_custom_call.1} parent=5 // pred_check
        %p299 = pneg %p298
      $region42: #{tpu_custom_call.1} parent=5 // pred_check_branch
        %301 = sbr.rel (%p299) target = $region44
      $region43: #{tpu_custom_call.1} parent=5 // pred_region
        %s302 = ssub.s32 %s17, 2
        // Predicated region
        $region45: #{tpu_custom_call.1} parent=43 // pred_check
          %p303 = pneg %p116
        $region46: #{tpu_custom_call.1} parent=43 // pred_check_branch
          %305 = sbr.rel (%p303) target = $region48
        $region47: #{tpu_custom_call.1} parent=43 // pred_region
          %s306 = sand.u32 %s101, 1
          %s307 = scalar_lea.sflag [#allocation4], %s306
          %s308 = sand.u32 %s101, 1
          %s309 = smul.addr %s308, 8
          %s310 = scalar_lea.vmem [#allocation7], %s309
          %311 = dma.done %s307, 128
        $region48: #{tpu_custom_call.1} parent=43 // pred_fallthru
          _
      $region44: #{tpu_custom_call.1} parent=5 // pred_fallthru
        _
    $region6: #{tpu_custom_call.1} parent=1 // loop_footer
      %s21 = sadd.s32 1, %s17
    $region7: #{tpu_custom_call.1} parent=1 // loop_footer_branch
      %16 = sbr.rel target = $region3
    $region8: #{tpu_custom_call.1} parent=1 // loop_exit
      _
    %312 = vsyncpa [#allocation3], 1
    %s313 = scalar_lea.sflag [#allocation3], 1
    %314 = vsyncpa %s313, 1
    %315 = vsyncpa [#allocation6], 1
    %s316 = scalar_lea.sflag [#allocation6], 1
    %317 = vsyncpa %s316, 1
    %318 = vsyncpa [#allocation4], 1
    %s319 = scalar_lea.sflag [#allocation4], 1
    %320 = vsyncpa %s319, 1

</llo_original>
